<compile_context>
chip_gen: v6e
topology: v6e:2x2x1
jax: 0.10.0
libtpu: 0.0.40
codegen_flags: <defaults>
</compile_context>

<pallas_src>
import functools
import warnings

import jax
import jax.numpy as jnp
from jax.experimental import pallas as pl
from jax.experimental.pallas import tpu as pltpu

# Donation is expected to be consumed (output aliases the input); silence the
# advisory warning if a particular shape/layout prevents XLA from using it.
warnings.filterwarnings("ignore", message="Some donated buffers were not usable")

_TILE_TARGET_BYTES = 4 * 1024 * 1024   # ~4 MiB payload per block (fast path)
_RAGGED_COL_TILE = 64 * 1024           # elements per block on the ragged-HW path
_LANE_WIDTHS = (8192, 4096, 2048, 1024, 512, 256, 128)


def _threshold_gather_kernel(sel_ref, x_ref, thr_ref, o_ref):
    # sel_ref: (num_sel,) SMEM scalar-prefetch channel indices (only consumed
    #          by the index_maps).
    # x_ref / o_ref: (1, r_tile, l_tile) VMEM tile of one selected channel.
    # thr_ref: (1,) float32 threshold in SMEM.
    del sel_ref
    o_ref[...] = (x_ref[...] > thr_ref[0]).astype(o_ref.dtype)


@functools.partial(jax.jit, donate_argnums=(0,))
def _binary_threshold_jit(x, thr_arr, sel_idx):
    n, c, h, w = x.shape
    hw = h * w
    itemsize = x.dtype.itemsize

    if hw % 128 == 0:
        # Lane-dense view (C, rows, lane): lane = widest 128-multiple dividing HW.
        lane = next(l for l in _LANE_WIDTHS if hw % l == 0)
        rows = hw // lane
        # Row tile targeting ~4 MiB per block; multiple of 8 (sublane rule) or
        # the full extent.  Ragged last row-tile is handled by masked edge DMAs.
        max_rows = max(8, (_TILE_TARGET_BYTES // (lane * itemsize)) // 8 * 8)
        r_tile = rows if rows <= max_rows else max_rows
        l_tile = lane
    else:
        # Ragged HW: one (1, 1, col_tile) slab per selected channel, tiled along
        # the lane axis (col_tile multiple of 128 or the full extent).
        lane = hw
        rows = 1
        r_tile = 1
        l_tile = hw if hw <= _RAGGED_COL_TILE else _RAGGED_COL_TILE

    x3 = x.reshape(c, rows, lane)

    spec = pl.BlockSpec(
        (1, r_tile, l_tile),
        lambda ci, ri, li, sel_ref: (sel_ref[ci], ri, li))

    out3 = pl.pallas_call(
        _threshold_gather_kernel,
        out_shape=jax.ShapeDtypeStruct(x3.shape, x3.dtype),
        grid_spec=pltpu.PrefetchScalarGridSpec(
            num_scalar_prefetch=1,
            # Channel outermost so consecutive steps stream contiguous HBM
            # addresses within one channel.
            grid=(sel_idx.shape[0], pl.cdiv(rows, r_tile), pl.cdiv(lane, l_tile)),
            in_specs=[spec,
                      pl.BlockSpec(memory_space=pltpu.MemorySpace.SMEM)],
            out_specs=spec,
        ),
        # Alias x3 -> output: untouched channels are never read or written by
        # the kernel, they simply stay in the (aliased, donated) output buffer.
        input_output_aliases={1: 0},
        compiler_params=pltpu.CompilerParams(
            # Every grid step writes a disjoint output block -> fully parallel
            # (lets v7x megacore shard even when some axes have extent 1).
            dimension_semantics=("parallel", "parallel", "parallel"),
            # Double-buffered in+out of a 4 MiB tile is 16 MiB; 32 MiB is safe
            # on v5e/v6e (128 MiB physical) and v7x (64 MiB physical per TC).
            vmem_limit_bytes=32 * 1024 * 1024),
    )(sel_idx, x3, thr_arr)

    return out3.reshape(n, c, h, w)


def binary_threshold(x, params, indicies):
    """Mirrors BinaryThreshold.forward.  NOTE: the (float32) input buffer is
    donated to enable true in-place aliasing; do not reuse `x` afterwards."""
    # Mirrors the PyTorch parameter validation (print-only, does not raise).
    if not isinstance(params[0], float) or params[0] < -1 or params[0] > 1:
        print('Binary threshold parameter should be a float between -1 and 1.')
    threshold = float(params[0])

    x = jnp.asarray(x)
    n, c, h, w = x.shape
    # PyTorch: `if i in indicies` -> out-of-range entries never match and
    # duplicates apply once.  Dedupe + filter so the gather grid is well-formed.
    sel = tuple(sorted({int(i) for i in indicies if 0 <= int(i) < c}))
    if not sel:
        return x                          # nothing to binarize: pure pass-through

    assert n == 1, "BinaryThreshold semantics require batch size 1 (PyTorch squeeze)."

    # PyTorch emits float32 binarized channels; torch.cat then promotes the
    # whole output to float32.
    if x.dtype != jnp.float32:
        x = x.astype(jnp.float32)

    thr_arr = jnp.asarray([threshold], dtype=jnp.float32)
    sel_idx = jnp.asarray(sel, dtype=jnp.int32)
    return _binary_threshold_jit(x, thr_arr, sel_idx)


if __name__ == "__main__":
    def reference(x, params, indicies):
        c = x.shape[1]
        sel = {int(i) for i in indicies if 0 <= int(i) < c}
        if not sel:
            return x
        out = x.astype(jnp.float32)
        for i in sel:
            out = out.at[:, i].set((x[:, i] > params[0]).astype(jnp.float32))
        return out

    k0, k1, k2 = jax.random.split(jax.random.PRNGKey(0), 3)

    # Case 1: lane-dense fast path (H*W = 256, multiple of 128).
    x1 = jax.random.normal(k0, (1, 4, 16, 16), dtype=jnp.float32)
    p1, idx1 = [0.0], [1, 3]
    ref1 = reference(x1, p1, idx1)            # computed BEFORE x1 is donated
    out1 = jax.block_until_ready(binary_threshold(x1, p1, idx1))
    assert out1.shape == (1, 4, 16, 16) and out1.dtype == jnp.float32
    assert jnp.allclose(out1, ref1), "fast-path mismatch vs reference"

    # Case 2: ragged path (H*W = 100, not a multiple of 128).
    x2 = jax.random.normal(k1, (1, 3, 10, 10), dtype=jnp.float32)
    p2, idx2 = [0.25], [0, 2]
    ref2 = reference(x2, p2, idx2)
    out2 = jax.block_until_ready(binary_threshold(x2, p2, idx2))
    assert out2.shape == (1, 3, 10, 10) and out2.dtype == jnp.float32
    assert jnp.allclose(out2, ref2), "ragged-path mismatch vs reference"

    # Case 3: bf16 input -> float32 output (PyTorch cat promotion semantics).
    x3 = jax.random.normal(k2, (1, 2, 8, 16), dtype=jnp.bfloat16)
    p3, idx3 = [0.5], [0]
    ref3 = reference(x3, p3, idx3)
    out3 = jax.block_until_ready(binary_threshold(x3, p3, idx3))
    assert out3.shape == (1, 2, 8, 16) and out3.dtype == jnp.float32
    assert jnp.allclose(out3, ref3), "dtype-promotion path mismatch vs reference"

    print("KERNEL_OK")
</pallas_src>

<mosaic_0001>
module attributes {stable_mosaic.version = 11 : i64} {
  func.func @_threshold_gather_kernel(%arg0: i32, %arg1: i32, %arg2: i32, %arg3: memref<2xi32, #tpu.memory_space<smem>>, %arg4: memref<1x1x256xf32, #tpu.memory_space<vmem>>, %arg5: memref<1xf32, #tpu.memory_space<smem>>, %arg6: memref<1x1x256xf32, #tpu.memory_space<vmem>>) attributes {dimension_semantics = [#tpu.dimension_semantics<parallel>, #tpu.dimension_semantics<parallel>, #tpu.dimension_semantics<parallel>], iteration_bounds = array<i64: 2, 1, 1>, scalar_prefetch = 1 : i64, scratch_operands = 0 : i64, tpu.core_type = #tpu.core_type<tc>, window_params = [{transform_indices = @transform_0, window_bounds = array<i64: 1, 1, 256>}, {transform_indices = @transform_1, window_bounds = array<i64: 1>}, {transform_indices = @transform_2, window_bounds = array<i64: 1, 1, 256>}]} {
    %c0 = arith.constant 0 : index
    %c0_0 = arith.constant 0 : index
    %c0_1 = arith.constant 0 : index
    %0 = vector.load %arg4[%c0, %c0_0, %c0_1] : memref<1x1x256xf32, #tpu.memory_space<vmem>>, vector<1x1x256xf32>
    %c0_2 = arith.constant 0 : index
    %1 = memref.load %arg5[%c0_2] : memref<1xf32, #tpu.memory_space<smem>>
    %2 = vector.broadcast %1 : f32 to vector<1x1x256xf32>
    %3 = arith.cmpf ogt, %0, %2 : vector<1x1x256xf32>
    %4 = arith.extui %3 : vector<1x1x256xi1> to vector<1x1x256xi32>
    %5 = arith.sitofp %4 : vector<1x1x256xi32> to vector<1x1x256xf32>
    %c0_3 = arith.constant 0 : index
    %c0_4 = arith.constant 0 : index
    %c0_5 = arith.constant 0 : index
    %6 = vector.load %arg6[%c0_3, %c0_4, %c0_5] : memref<1x1x256xf32, #tpu.memory_space<vmem>>, vector<1x1x256xf32>
    tpu.vector_store %arg6[%c0_3, %c0_4, %c0_5], %5 {strides = array<i32>} : memref<1x1x256xf32, #tpu.memory_space<vmem>>, vector<1x1x256xf32>,
    return
  }
  func.func @transform_0(%arg0: i32, %arg1: i32, %arg2: i32, %arg3: memref<2xi32, #tpu.memory_space<smem>>) -> (i32, i32, i32) {
    %0 = arith.index_cast %arg0 : i32 to index
    %1 = memref.load %arg3[%0] : memref<2xi32, #tpu.memory_space<smem>>
    %c0_i32 = arith.constant 0 : i32
    return %1, %arg1, %arg2 : i32, i32, i32
  }
  func.func @transform_1(%arg0: i32, %arg1: i32, %arg2: i32, %arg3: memref<2xi32, #tpu.memory_space<smem>>) -> i32 {
    %c0_i32 = arith.constant 0 : i32
    %c0_i32_0 = arith.constant 0 : i32
    return %c0_i32 : i32
  }
  func.func @transform_2(%arg0: i32, %arg1: i32, %arg2: i32, %arg3: memref<2xi32, #tpu.memory_space<smem>>) -> (i32, i32, i32) {
    %0 = arith.index_cast %arg0 : i32 to index
    %1 = memref.load %arg3[%0] : memref<2xi32, #tpu.memory_space<smem>>
    %c0_i32 = arith.constant 0 : i32
    return %1, %arg1, %arg2 : i32, i32, i32
  }
}

</mosaic_0001>

<llo_original>
// kernel: _binary_threshold_jit.1
$region0: #{_binary_threshold_jit.1}
  #allocation0 [shape = 'u32[]', space=smem, size = 0x4, offset = 0x4, fixed_abs, tag = 'smem constant byte address 0x4 - core index']
  #allocation1 [shape = 'u32[144,128]{1,0:T(1,128)}', space=vmem, size = 0x12000, scoped, tag = 'internal scratch']
  #allocation2 [shape = 's32[1]{0}', space=sflag, size = 0x4, scoped, tag = 'scoped memory for _binary_threshold_jit.1']
  #allocation3 [shape = 'u8[512]{0}', space=smem, size = 0x200, scoped, tag = 'prefetched SMEM operand 0']
  #allocation4 [shape = 'f32[1]{0:T(128)S(6)}', space=smem, size = 0x200, scoped, tag = 'scoped memory for _binary_threshold_jit.1']
  %s0 = inlined_call_operand.vmem [shape: s32[2], index: 0, kind: input, shape index: {}]
  %s1 = inlined_call_operand.vmem [shape: f32[4,1,256], index: 1, kind: input, shape index: {}, may-alias: {1,3}]
  %s2 = inlined_call_operand.<no memory space> [shape: f32[1], index: 2, kind: input, shape index: {}]
  %s3 = inlined_call_operand.vmem [shape: f32[4,1,256], index: 3, kind: output, shape index: {}, may-alias: {1,3}]
  %s4 = sld [smem:[#allocation0]]
  $region41: #{_binary_threshold_jit.1} parent=0
    _
  %s6 = ssub.s32 1, %s4
  %s7 = scalar_select 0, %s6, %s4
  %s8 = sshll.u32 %s0, 4
  %s9 = int_to_ptr.vmem [resolvable:$true] %s8
  %11 = dma.vmem_to_smem %s9, 16, [#allocation3], [#allocation2]
  %12 = sst [smem:[#allocation4]] %s2
  %13 = dma.done [#allocation2], 16
  %14 = sfence
  loop: start=0, step=1, limit=4
  $region2: #{_binary_threshold_jit.1} parent=0 // loop_pre_header
    _
  $region3: #{_binary_threshold_jit.1} parent=0 // loop_header
    %s16 = sphi 0, %s20
    %p17 = scmp.ge.s32.totalorder %s16, 4
    %s23 = sphi 0, %s42
    %s24 = sphi 0, %s38
    %s25 = sphi 0, %s34
    %s26 = sphi 0, %s23
    %s27 = sphi 0, %s24
    %s28 = sphi 0, %s25
    %s29 = sphi 0, %s26
    %s30 = sphi 0, %s27
    %s31 = sphi 0, %s28
    %s51 = sphi 0, %s53
    %s54 = sphi 0, %s51
    %s55 = sphi 0, %s54
    %s71 = sphi 0, %s55
    %s75 = sphi 0, %s75
    %s77 = sphi 0, %s75
    %s78 = sphi 0, %s77
    %s92 = sphi 0, %s78
    %s104 = sphi 0, %s106
    %s107 = sphi 0, %s104
    %s108 = sphi 0, %s107
    %s124 = sphi 0, %s108
  $region4: #{_binary_threshold_jit.1} parent=0 // loop_header_branch
    %19 = sbr.rel (%p17) target = $region8
  $region5: #{_binary_threshold_jit.1} parent=0 // loop_body
    %s21 = ssub.s32 %s16, 1
    %s22 = ssub.s32 %s16, 2
    %s32 = sadd.s32 1, %s25
    %p33 = scmp.ge.s32.totalorder %s32, 1
    %s34 = scalar_select %p33, 0, %s32
    %s35 = sadd.s32 1, %s24
    %s36 = scalar_select %p33, %s35, %s24
    %p37 = scmp.ge.s32.totalorder %s36, 1
    %s38 = scalar_select %p37, 0, %s36
    %s39 = sadd.s32 1, %s23
    %s40 = scalar_select %p37, %s39, %s23
    %p41 = scmp.ge.s32.totalorder %s40, 2
    %s42 = scalar_select %p41, 0, %s40
    %s43 = sld [smem:[#allocation3 + %s23]]
    %s44 = sld [smem:[#allocation3 + %s42]]
    %s45 = ssub.s32 %s43, %s44
    %s46 = ssub.s32 %s24, %s38
    %s47 = sor.u32 %s45, %s46
    %s48 = ssub.s32 %s25, %s34
    %s49 = sor.u32 %s47, %s48
    %p50 = scmp.eq.s32.totalorder %s49, 0
    %s52 = sadd.s32 %s51, 1
    %s53 = scalar_select %p50, %s51, %s52
    %p56 = pneg %p50
    %p57 = scmp.eq.s32.totalorder %s16, 1
    %p58 = por %p56, %p57
    %p59 = scmp.ne.s32.totalorder %s51, %s54
    %p60 = scmp.eq.s32.totalorder %s16, 0
    %p61 = por %p59, %p60
    %p62 = scmp.ne.s32.totalorder %s51, %s54
    %p63 = scmp.eq.s32.totalorder %s21, 1
    %p64 = por %p62, %p63
    %p65 = scmp.ne.s32.totalorder %s54, %s55
    %p66 = scmp.eq.s32.totalorder %s21, 0
    %p67 = por %p65, %p66
    %p68 = scmp.ne.s32.totalorder %s54, %s55
    %p69 = scmp.eq.s32.totalorder %s22, 1
    %p70 = por %p68, %p69
    %p72 = scmp.ne.s32.totalorder %s55, %s71
    %p73 = scmp.eq.s32.totalorder %s22, 0
    %p74 = por %p72, %p73
    %s76 = sadd.s32 %s75, 1
    %p79 = scmp.eq.s32.totalorder %s16, 1
    %p80 = scmp.ne.s32.totalorder %s75, %s77
    %p81 = scmp.eq.s32.totalorder %s16, 0
    %p82 = por %p80, %p81
    %p83 = scmp.ne.s32.totalorder %s75, %s77
    %p84 = scmp.eq.s32.totalorder %s21, 1
    %p85 = por %p83, %p84
    %p86 = scmp.ne.s32.totalorder %s77, %s78
    %p87 = scmp.eq.s32.totalorder %s21, 0
    %p88 = por %p86, %p87
    %p89 = scmp.ne.s32.totalorder %s77, %s78
    %p90 = scmp.eq.s32.totalorder %s22, 1
    %p91 = por %p89, %p90
    %p93 = scmp.ne.s32.totalorder %s78, %s92
    %p94 = scmp.eq.s32.totalorder %s22, 0
    %p95 = por %p93, %p94
    %s96 = sld [smem:[#allocation3 + %s23]]
    %s97 = sld [smem:[#allocation3 + %s42]]
    %s98 = ssub.s32 %s96, %s97
    %s99 = ssub.s32 %s24, %s38
    %s100 = sor.u32 %s98, %s99
    %s101 = ssub.s32 %s25, %s34
    %s102 = sor.u32 %s100, %s101
    %p103 = scmp.eq.s32.totalorder %s102, 0
    %s105 = sadd.s32 %s104, 1
    %s106 = scalar_select %p103, %s104, %s105
    %p109 = pneg %p103
    %p110 = scmp.eq.s32.totalorder %s16, 1
    %p111 = por %p109, %p110
    %p112 = scmp.ne.s32.totalorder %s104, %s107
    %p113 = scmp.eq.s32.totalorder %s16, 0
    %p114 = por %p112, %p113
    %p115 = scmp.ne.s32.totalorder %s104, %s107
    %p116 = scmp.eq.s32.totalorder %s21, 1
    %p117 = por %p115, %p116
    %p118 = scmp.ne.s32.totalorder %s107, %s108
    %p119 = scmp.eq.s32.totalorder %s21, 0
    %p120 = por %p118, %p119
    %p121 = scmp.ne.s32.totalorder %s107, %s108
    %p122 = scmp.eq.s32.totalorder %s22, 1
    %p123 = por %p121, %p122
    %p125 = scmp.ne.s32.totalorder %s108, %s124
    %p126 = scmp.eq.s32.totalorder %s22, 0
    %p127 = por %p125, %p126
    %p128 = scmp.le.s32.totalorder 1, %s16
    %p129 = scmp.lt.s32.totalorder %s16, 3
    %p130 = pnand %p128, %p129
    %p131 = pneg %p130
    // Predicated region
    $region9: #{_binary_threshold_jit.1} parent=5 // pred_check
      _
    $region10: #{_binary_threshold_jit.1} parent=5 // pred_check_branch
      %133 = sbr.rel (%p130) target = $region12
    $region11: #{_binary_threshold_jit.1} parent=5 // pred_region
      %s134 = ssub.s32 %s16, 1
      // Predicated region
      $region13: #{_binary_threshold_jit.1} parent=11 // pred_check
        %p135 = pneg %p88
      $region14: #{_binary_threshold_jit.1} parent=11 // pred_check_branch
        %137 = sbr.rel (%p135) target = $region16
      $region15: #{_binary_threshold_jit.1} parent=11 // pred_region
        _
      $region16: #{_binary_threshold_jit.1} parent=11 // pred_fallthru
        _
    $region12: #{_binary_threshold_jit.1} parent=5 // pred_fallthru
      _
    %p138 = scmp.lt.s32.totalorder %s16, 2
    // Predicated region
    $region17: #{_binary_threshold_jit.1} parent=5 // pred_check
      %p139 = pneg %p138
    $region18: #{_binary_threshold_jit.1} parent=5 // pred_check_branch
      %141 = sbr.rel (%p139) target = $region20
    $region19: #{_binary_threshold_jit.1} parent=5 // pred_region
      // Predicated region
      $region21: #{_binary_threshold_jit.1} parent=19 // pred_check
        %p142 = pneg %p61
      $region22: #{_binary_threshold_jit.1} parent=19 // pred_check_branch
        %144 = sbr.rel (%p142) target = $region24
      $region23: #{_binary_threshold_jit.1} parent=19 // pred_region
        %s145 = sld [smem:[#allocation3 + %s23]]
        %s146 = smul.u32 2, %s25
        %p147 = scmp.lt.s32.totalorder %s145, 3
        %s148 = scalar_select %p147, %s145, 3
        %p149 = scmp.lt.s32.totalorder %s24, 0
        %s150 = scalar_select %p149, %s24, 0
        %p151 = scmp.lt.s32.totalorder %s146, 1
        %s152 = scalar_select %p151, %s146, 1
        %s153 = smul.addr %s150, 2
        %s154 = sadd.s32 %s152, %s153
        %s155 = smul.addr %s148, 2
        %s156 = sadd.s32 %s154, %s155
        %s157 = scalar_lea.vmem %s1, %s156
        %s158 = sld [smem:[#allocation3 + %s23]]
        %s159 = smul.u32 2, %s25
      $region24: #{_binary_threshold_jit.1} parent=19 // pred_fallthru
        _
    $region20: #{_binary_threshold_jit.1} parent=5 // pred_fallthru
      _
    %p160 = scmp.le.s32.totalorder 1, %s16
    %p161 = scmp.lt.s32.totalorder %s16, 3
    %p162 = pnand %p160, %p161
    %p163 = pneg %p162
    // Predicated region
    $region25: #{_binary_threshold_jit.1} parent=5 // pred_check
      _
    $region26: #{_binary_threshold_jit.1} parent=5 // pred_check_branch
      %165 = sbr.rel (%p162) target = $region28
    $region27: #{_binary_threshold_jit.1} parent=5 // pred_region
      %s166 = ssub.s32 %s16, 1
      %s167 = sld [smem:[#allocation3 + %s26]]
      %s168 = smul.u32 2, %s28
      %p169 = scmp.lt.s32.totalorder %s167, 3
      %s170 = scalar_select %p169, %s167, 3
      %p171 = scmp.lt.s32.totalorder %s27, 0
      %s172 = scalar_select %p171, %s27, 0
      %p173 = scmp.lt.s32.totalorder %s168, 1
      %s174 = scalar_select %p173, %s168, 1
      %s175 = smul.addr %s172, 2
      %s176 = sadd.s32 %s174, %s175
      %s177 = smul.addr %s170, 2
      %s178 = sadd.s32 %s176, %s177
      %s179 = scalar_lea.vmem %s1, %s178
      %p180 = pneg %p67
      %p181 = pneg %p64
      %p182 = pneg %p88
      %p183 = pneg %p85
      %p184 = pneg %p120
      %p185 = pneg %p117
      %s186 = sld [smem:[#allocation3 + %s26]]
      %s187 = smul.u32 2, %s28
      %p188 = scmp.lt.s32.totalorder %s186, 3
      %s189 = scalar_select %p188, %s186, 3
      %p190 = scmp.lt.s32.totalorder %s27, 0
      %s191 = scalar_select %p190, %s27, 0
      %p192 = scmp.lt.s32.totalorder %s187, 1
      %s193 = scalar_select %p192, %s187, 1
      %s194 = smul.addr %s191, 2
      %s195 = sadd.s32 %s193, %s194
      %s196 = smul.addr %s189, 2
      %s197 = sadd.s32 %s195, %s196
      %s198 = scalar_lea.vmem %s3, %s197
      %s199 = sld [smem:[#allocation3 + %s26]]
      %s200 = smul.u32 2, %s28
      %p201 = scmp.lt.s32.totalorder %s199, 3
      %s202 = scalar_select %p201, %s199, 3
      %p203 = scmp.lt.s32.totalorder %s27, 0
      %s204 = scalar_select %p203, %s27, 0
      %p205 = scmp.lt.s32.totalorder %s200, 1
      %s206 = scalar_select %p205, %s200, 1
      %s207 = smul.addr %s204, 2
      %s208 = sadd.s32 %s206, %s207
      %s209 = smul.addr %s202, 2
      %s210 = sadd.s32 %s208, %s209
      %s211 = scalar_lea.vmem %s1, %s210
      %s212 = sld [smem:[#allocation3 + %s26]]
      %s213 = smul.u32 2, %s28
      %s214 = sld [smem:[#allocation3 + %s26]]
      %s215 = smul.u32 2, %s28
      %p216 = scmp.lt.s32.totalorder %s214, 3
      %s217 = scalar_select %p216, %s214, 3
      %p218 = scmp.lt.s32.totalorder %s27, 0
      %s219 = scalar_select %p218, %s27, 0
      %p220 = scmp.lt.s32.totalorder %s215, 1
      %s221 = scalar_select %p220, %s215, 1
      %s222 = smul.addr %s219, 2
      %s223 = sadd.s32 %s221, %s222
      %s224 = smul.addr %s217, 2
      %s225 = sadd.s32 %s223, %s224
      %s226 = scalar_lea.vmem %s3, %s225
      %s227 = sld [smem:[#allocation3 + %s26]]
      %s228 = smul.u32 2, %s28
      %v229 = vld [vmem:[%s211] sm:$0x3]
      %s230 = sld [smem:[#allocation4]]
      %v231 = vstv %s230
      %vm232 = vcmp.gt.f32.partialorder %v229, %v231
      %v233 = vsel %vm232, 1, 0
      %v234 = vcvt.s32.f32 %v233
      %v235 = vlaneseq
      %vm236 = vcmp.ge.s32.totalorder %v235, 0
      %vm237 = vcmp.lt.s32.totalorder %v235, 256
      %vm238 = vmand %vm236, %vm237
      %239 = vst.msk [vmem:[%s226] sm:$0x3] %vm238, %v234
      %s240 = sld [smem:[#allocation3 + %s26]]
      %s241 = smul.u32 2, %s28
      %p242 = scmp.lt.s32.totalorder %s240, 3
      %s243 = scalar_select %p242, %s240, 3
      %p244 = scmp.lt.s32.totalorder %s27, 0
      %s245 = scalar_select %p244, %s27, 0
      %p246 = scmp.lt.s32.totalorder %s241, 1
      %s247 = scalar_select %p246, %s241, 1
      %s248 = smul.addr %s245, 2
      %s249 = sadd.s32 %s247, %s248
      %s250 = smul.addr %s243, 2
      %s251 = sadd.s32 %s249, %s250
      %s252 = scalar_lea.vmem %s3, %s251
      // Predicated region
      $region29: #{_binary_threshold_jit.1} parent=27 // pred_check
        %p253 = pneg %p117
      $region30: #{_binary_threshold_jit.1} parent=27 // pred_check_branch
        %255 = sbr.rel (%p253) target = $region32
      $region31: #{_binary_threshold_jit.1} parent=27 // pred_region
        %s256 = sld [smem:[#allocation3 + %s26]]
        %s257 = smul.u32 2, %s28
      $region32: #{_binary_threshold_jit.1} parent=27 // pred_fallthru
        _
    $region28: #{_binary_threshold_jit.1} parent=5 // pred_fallthru
      _
    %p258 = scmp.le.s32.totalorder 2, %s16
    // Predicated region
    $region33: #{_binary_threshold_jit.1} parent=5 // pred_check
      %p259 = pneg %p258
    $region34: #{_binary_threshold_jit.1} parent=5 // pred_check_branch
      %261 = sbr.rel (%p259) target = $region36
    $region35: #{_binary_threshold_jit.1} parent=5 // pred_region
      %s262 = ssub.s32 %s16, 2
      // Predicated region
      $region37: #{_binary_threshold_jit.1} parent=35 // pred_check
        %p263 = pneg %p123
      $region38: #{_binary_threshold_jit.1} parent=35 // pred_check_branch
        %265 = sbr.rel (%p263) target = $region40
      $region39: #{_binary_threshold_jit.1} parent=35 // pred_region
        %s266 = sld [smem:[#allocation3 + %s29]]
        %s267 = smul.u32 2, %s31
        %p268 = scmp.lt.s32.totalorder %s266, 3
        %s269 = scalar_select %p268, %s266, 3
        %p270 = scmp.lt.s32.totalorder %s30, 0
        %s271 = scalar_select %p270, %s30, 0
        %p272 = scmp.lt.s32.totalorder %s267, 1
        %s273 = scalar_select %p272, %s267, 1
        %s274 = smul.addr %s271, 2
        %s275 = sadd.s32 %s273, %s274
        %s276 = smul.addr %s269, 2
        %s277 = sadd.s32 %s275, %s276
        %s278 = scalar_lea.vmem %s3, %s277
      $region40: #{_binary_threshold_jit.1} parent=35 // pred_fallthru
        _
    $region36: #{_binary_threshold_jit.1} parent=5 // pred_fallthru
      _
  $region6: #{_binary_threshold_jit.1} parent=0 // loop_footer
    %s20 = sadd.s32 1, %s16
  $region7: #{_binary_threshold_jit.1} parent=0 // loop_footer_branch
    %15 = sbr.rel target = $region3
  $region8: #{_binary_threshold_jit.1} parent=0 // loop_exit
    _

</llo_original>
